<compile_context>
chip_gen: v5e
topology: v5e:2x2
jax: 0.10.0
libtpu: 0.0.40
codegen_flags: <defaults>
</compile_context>

<pallas_src>
import jax
import jax.numpy as jnp
from jax import lax
from jax.experimental import pallas as pl
from jax.experimental.pallas import tpu as pltpu

NEG_INF = -1e30
NEG_SLOPE = 0.2   # GATConv default negative_slope
LANE = 128


def _round_up(x, m):
    return (x + m - 1) // m * m


def _pad2(a, rows, cols):
    return jnp.pad(a, ((0, rows - a.shape[0]), (0, cols - a.shape[1])))


# ---------------------------------------------------------------------------
# Kernel 1: per-layer projection + attention logits
# ---------------------------------------------------------------------------
def _project_kernel(x_ref, w_ref, asrc_ref, adst_ref,
                    h_ref, adst_out_ref, asrc_out_ref):
    x = x_ref[...]                                                   # (tm, Fp) f32
    h = jnp.dot(x.astype(jnp.bfloat16), w_ref[...],
                preferred_element_type=jnp.float32)                  # (tm, Hp) f32
    # a_dst[i] = <h_i, att_dst>  -> column (tm, 1): VPU multiply + lane reduce.
    adst_out_ref[...] = jnp.sum(h * adst_ref[...], axis=-1, keepdims=True)
    # a_src[j] = <h_j, att_src>  -> lane-dense row (1, tm); tiny matmul, only
    # R calls per layer (outside the (i, k) attention loop).
    asrc_out_ref[...] = lax.dot_general(
        asrc_ref[...], h, (((1,), (1,)), ((), ())),
        preferred_element_type=jnp.float32)
    h_ref[...] = h.astype(jnp.bfloat16)


# ---------------------------------------------------------------------------
# Kernel 2: attention + aggregation + bias + ReLU + fused JK running max
# ---------------------------------------------------------------------------
def _attend_kernel(adst_ref, asrc_ref, adj_ref, h_ref, bias_ref, jk_ref,
                   out_ref, jk_out_ref, m_sc, l_sc, acc_sc):
    k = pl.program_id(1)

    @pl.when(k == 0)
    def _():
        m_sc[...] = jnp.full_like(m_sc, NEG_INF)
        l_sc[...] = jnp.zeros_like(l_sc)
        acc_sc[...] = jnp.zeros_like(acc_sc)

    # e[i, j] = LeakyReLU(a_dst[i] + a_src[j]) for edge j -> i, masked by adj.
    e = adst_ref[...] + asrc_ref[...]                                # (tm, tk) f32
    e = jnp.where(e > 0, e, NEG_SLOPE * e)
    e = jnp.where(adj_ref[...] != 0, e, NEG_INF)

    # Online softmax over source-node tiles (running max / sum / accumulator).
    m_prev = m_sc[...]
    m_new = jnp.maximum(m_prev, jnp.max(e, axis=-1, keepdims=True))
    corr = jnp.exp(m_prev - m_new)
    p = jnp.exp(e - m_new)                                           # <= 1, f32
    l_sc[...] = corr * l_sc[...] + jnp.sum(p, axis=-1, keepdims=True)
    acc_sc[...] = corr * acc_sc[...] + jnp.dot(
        p.astype(jnp.bfloat16), h_ref[...], preferred_element_type=jnp.float32)
    m_sc[...] = m_new

    @pl.when(k == pl.num_programs(1) - 1)
    def _():
        out = acc_sc[...] * pl.reciprocal(l_sc[...], approx=True) + bias_ref[...]
        out = jnp.maximum(out, 0.0)                                  # ReLU(inplace=True)
        out_ref[...] = out
        jk_out_ref[...] = jnp.maximum(jk_ref[...], out)              # JK 'max' fused


# ---------------------------------------------------------------------------
# Kernel 3: final Linear on the JK max
# ---------------------------------------------------------------------------
def _jk_linear_kernel(jk_ref, w_ref, b_ref, out_ref):
    out_ref[...] = jnp.dot(jk_ref[...].astype(jnp.bfloat16), w_ref[...],
                           preferred_element_type=jnp.float32) + b_ref[...]


# ---------------------------------------------------------------------------
# Wrappers
# ---------------------------------------------------------------------------
_VMEM_LIMIT = 32 * 1024 * 1024   # safe scoped limit on v5e/v6e/v7x


def gat_layer(x_p, adj_i8, w_bf, asrc_p, adst_p, b_p, jk, *, tile_n):
    np_, fp = x_p.shape
    hp = w_bf.shape[1]
    r = np_ // tile_n
    kgrid = np_ // tile_n

    h_bf, a_dst, a_src = pl.pallas_call(
        _project_kernel,
        out_shape=(jax.ShapeDtypeStruct((np_, hp), jnp.bfloat16),
                   jax.ShapeDtypeStruct((np_, 1), jnp.float32),
                   jax.ShapeDtypeStruct((1, np_), jnp.float32)),
        grid_spec=pltpu.PrefetchScalarGridSpec(
            num_scalar_prefetch=0, grid=(r,),
            in_specs=[pl.BlockSpec((tile_n, fp), lambda i: (i, 0)),
                      pl.BlockSpec((fp, hp), lambda i: (0, 0)),
                      pl.BlockSpec((1, hp), lambda i: (0, 0)),
                      pl.BlockSpec((1, hp), lambda i: (0, 0))],
            out_specs=[pl.BlockSpec((tile_n, hp), lambda i: (i, 0)),
                       pl.BlockSpec((tile_n, 1), lambda i: (i, 0)),
                       pl.BlockSpec((1, tile_n), lambda i: (0, i))]),
        compiler_params=pltpu.CompilerParams(
            dimension_semantics=("parallel",),
            vmem_limit_bytes=_VMEM_LIMIT),
    )(x_p, w_bf, asrc_p, adst_p)

    cost = pl.CostEstimate(
        flops=2 * np_ * np_ * hp + 10 * np_ * np_,
        transcendentals=2 * np_ * np_,
        bytes_accessed=np_ * np_ + np_ * hp * (2 * r + 12) + np_ * 8)

    out, jk_new = pl.pallas_call(
        _attend_kernel,
        out_shape=(jax.ShapeDtypeStruct((np_, hp), jnp.float32),
                   jax.ShapeDtypeStruct((np_, hp), jnp.float32)),
        grid_spec=pltpu.PrefetchScalarGridSpec(
            num_scalar_prefetch=0, grid=(r, kgrid),
            in_specs=[pl.BlockSpec((tile_n, 1), lambda i, k: (i, 0)),      # a_dst
                      pl.BlockSpec((1, tile_n), lambda i, k: (0, k)),      # a_src
                      pl.BlockSpec((tile_n, tile_n), lambda i, k: (i, k)), # adj int8
                      pl.BlockSpec((tile_n, hp), lambda i, k: (k, 0)),     # h bf16
                      pl.BlockSpec((1, hp), lambda i, k: (0, 0)),          # bias
                      pl.BlockSpec((tile_n, hp), lambda i, k: (i, 0))],    # jk prev
            out_specs=[pl.BlockSpec((tile_n, hp), lambda i, k: (i, 0)),
                       pl.BlockSpec((tile_n, hp), lambda i, k: (i, 0))],
            scratch_shapes=[pltpu.VMEM((tile_n, 1), jnp.float32),
                            pltpu.VMEM((tile_n, 1), jnp.float32),
                            pltpu.VMEM((tile_n, hp), jnp.float32)]),
        compiler_params=pltpu.CompilerParams(
            dimension_semantics=("parallel", "arbitrary"),
            vmem_limit_bytes=_VMEM_LIMIT),
        cost_estimate=cost,
    )(a_dst, a_src, adj_i8, h_bf, b_p, jk)
    return out, jk_new


def jk_linear(jk, w_out_bf, b_out_p, *, tile_n):
    np_, hp = jk.shape
    op = w_out_bf.shape[1]
    r = np_ // tile_n
    return pl.pallas_call(
        _jk_linear_kernel,
        out_shape=jax.ShapeDtypeStruct((np_, op), jnp.float32),
        grid_spec=pltpu.PrefetchScalarGridSpec(
            num_scalar_prefetch=0, grid=(r,),
            in_specs=[pl.BlockSpec((tile_n, hp), lambda i: (i, 0)),
                      pl.BlockSpec((hp, op), lambda i: (0, 0)),
                      pl.BlockSpec((1, op), lambda i: (0, 0))],
            out_specs=pl.BlockSpec((tile_n, op), lambda i: (i, 0))),
        compiler_params=pltpu.CompilerParams(
            dimension_semantics=("parallel",),
            vmem_limit_bytes=_VMEM_LIMIT),
    )(jk, w_out_bf, b_out_p)


def build_dense_adj(edge_index, num_nodes, padded_nodes):
    """int8 adj[i, j] = 1 iff edge j -> i; self-loops on every (incl. padded) row.

    Self-loops on padded rows keep their softmax well-defined; padded columns
    are never unmasked for real rows, so padding cannot leak into real outputs.
    """
    src, dst = edge_index[0], edge_index[1]
    adj = jnp.zeros((padded_nodes, padded_nodes), jnp.int8)
    adj = adj.at[dst, src].set(jnp.int8(1))
    adj = jnp.maximum(adj, jnp.eye(padded_nodes, dtype=jnp.int8))
    return adj


def init_params(key, in_features, hidden_size, layers, output_size):
    params = {"layers": []}
    fin = in_features
    for _ in range(layers):
        key, k_w, k_as, k_ad, k_b = jax.random.split(key, 5)
        w = jax.random.normal(k_w, (fin, hidden_size), jnp.float32) * 0.1
        att_src = jax.random.normal(k_as, (1, hidden_size), jnp.float32) * 0.1
        att_dst = jax.random.normal(k_ad, (1, hidden_size), jnp.float32) * 0.1
        bias = jax.random.normal(k_b, (1, hidden_size), jnp.float32) * 0.1
        params["layers"].append((w, att_src, att_dst, bias))
        fin = hidden_size
    key, k_wo, k_bo = jax.random.split(key, 3)
    # jk_mode == 'max' -> Linear(hidden_size, output_size)
    params["w_out"] = jax.random.normal(k_wo, (hidden_size, output_size), jnp.float32) * 0.1
    params["b_out"] = jax.random.normal(k_bo, (1, output_size), jnp.float32) * 0.1
    return params


def gat_jk_forward(x, edge_index, params, *, tile_n=128):
    """Forward of GAT_JK_Model with jk_mode='max' (eval mode, dropout=identity)."""
    n, fin = x.shape
    hidden = params["layers"][0][0].shape[1]
    out_dim = params["w_out"].shape[1]

    np_ = _round_up(n, tile_n)
    hp = _round_up(hidden, LANE)
    op = _round_up(out_dim, LANE)

    adj = build_dense_adj(edge_index, n, np_)
    h = _pad2(x.astype(jnp.float32), np_, _round_up(fin, LANE))
    jk = jnp.zeros((np_, hp), jnp.float32)   # JK 'max' over post-ReLU (>=0) layers

    for (w, asrc, adst, b) in params["layers"]:
        fpl = _round_up(w.shape[0], LANE)
        w_bf = _pad2(w, fpl, hp).astype(jnp.bfloat16)
        h, jk = gat_layer(h, adj, w_bf,
                          _pad2(asrc, 1, hp), _pad2(adst, 1, hp), _pad2(b, 1, hp),
                          jk, tile_n=tile_n)

    w_out_bf = _pad2(params["w_out"], hp, op).astype(jnp.bfloat16)
    pred = jk_linear(jk, w_out_bf, _pad2(params["b_out"], 1, op), tile_n=tile_n)
    return pred[:n, :out_dim]


# ---------------------------------------------------------------------------
# Demo
# ---------------------------------------------------------------------------
if __name__ == "__main__":
    N, FIN, HIDDEN, LAYERS, OUT = 256, 16, 32, 2, 4   # jk_mode='max', dropout=0.0
    TILE_N = 128                                       # grid (2, 2): exercises tiling

    key = jax.random.PRNGKey(0)
    key, k_x = jax.random.split(key)
    x = jax.random.normal(k_x, (N, FIN), jnp.float32)

    # Deterministic small graph: bidirectional ring over N nodes.
    src = jnp.arange(N, dtype=jnp.int32)
    dst = (src + 1) % N
    edge_index = jnp.concatenate(
        [jnp.stack([src, dst], axis=0), jnp.stack([dst, src], axis=0)], axis=1
    )  # (2, 2N)

    params = init_params(key, FIN, HIDDEN, LAYERS, OUT)

    pred = gat_jk_forward(x, edge_index, params, tile_n=TILE_N)
    jax.block_until_ready(pred)
    assert pred.shape == (N, OUT)
    assert bool(jnp.all(jnp.isfinite(pred)))
    print("KERNEL_OK")
</pallas_src>

<mosaic_0001>
module attributes {stable_mosaic.version = 11 : i64} {
  func.func @_project_kernel(%arg0: i32, %arg1: memref<128x128xf32, #tpu.memory_space<vmem>>, %arg2: memref<128x128xbf16, #tpu.memory_space<vmem>>, %arg3: memref<1x128xf32, #tpu.memory_space<vmem>>, %arg4: memref<1x128xf32, #tpu.memory_space<vmem>>, %arg5: memref<128x128xbf16, #tpu.memory_space<vmem>>, %arg6: memref<128x1xf32, #tpu.memory_space<vmem>>, %arg7: memref<1x128xf32, #tpu.memory_space<vmem>>) attributes {dimension_semantics = [#tpu.dimension_semantics<parallel>], iteration_bounds = array<i64: 2>, scalar_prefetch = 0 : i64, scratch_operands = 0 : i64, tpu.core_type = #tpu.core_type<tc>, window_params = [{transform_indices = @transform_0, window_bounds = array<i64: 128, 128>}, {pipeline_mode = #tpu.pipeline_mode<synchronous>, transform_indices = @transform_1, window_bounds = array<i64: 128, 128>}, {pipeline_mode = #tpu.pipeline_mode<synchronous>, transform_indices = @transform_2, window_bounds = array<i64: 1, 128>}, {pipeline_mode = #tpu.pipeline_mode<synchronous>, transform_indices = @transform_3, window_bounds = array<i64: 1, 128>}, {transform_indices = @transform_4, window_bounds = array<i64: 128, 128>}, {transform_indices = @transform_5, window_bounds = array<i64: 128, 1>}, {transform_indices = @transform_6, window_bounds = array<i64: 1, 128>}]} {
    %c0 = arith.constant 0 : index
    %c0_0 = arith.constant 0 : index
    %0 = vector.load %arg1[%c0, %c0_0] : memref<128x128xf32, #tpu.memory_space<vmem>>, vector<128x128xf32>
    %1 = arith.truncf %0 : vector<128x128xf32> to vector<128x128xbf16>
    %c0_1 = arith.constant 0 : index
    %c0_2 = arith.constant 0 : index
    %2 = vector.load %arg2[%c0_1, %c0_2] : memref<128x128xbf16, #tpu.memory_space<vmem>>, vector<128x128xbf16>
    %cst = arith.constant dense<0.000000e+00> : vector<128x128xf32>
    %3 = tpu.matmul %1, %2, %cst {dimension_numbers = #tpu.dot_dimension_numbers<[1], [0], [0], [1], [0, 0, 1, 1], [], []>} : vector<128x128xbf16>, vector<128x128xbf16>, vector<128x128xf32> -> vector<128x128xf32>
    %c0_3 = arith.constant 0 : index
    %c0_4 = arith.constant 0 : index
    %4 = vector.load %arg4[%c0_3, %c0_4] : memref<1x128xf32, #tpu.memory_space<vmem>>, vector<1x128xf32>
    %5 = vector.broadcast %4 : vector<1x128xf32> to vector<128x128xf32>
    %6 = arith.mulf %3, %5 : vector<128x128xf32>
    %cst_5 = arith.constant dense<0.000000e+00> : vector<128xf32>
    %7 = vector.multi_reduction <add>, %6, %cst_5 [1] : vector<128x128xf32> to vector<128xf32>
    %8 = vector.shape_cast %7 : vector<128xf32> to vector<128x1xf32>
    %c0_6 = arith.constant 0 : index
    %c0_7 = arith.constant 0 : index
    %9 = vector.load %arg6[%c0_6, %c0_7] : memref<128x1xf32, #tpu.memory_space<vmem>>, vector<128x1xf32>
    tpu.vector_store %arg6[%c0_6, %c0_7], %8 {strides = array<i32>} : memref<128x1xf32, #tpu.memory_space<vmem>>, vector<128x1xf32>,
    %c0_8 = arith.constant 0 : index
    %c0_9 = arith.constant 0 : index
    %10 = vector.load %arg3[%c0_8, %c0_9] : memref<1x128xf32, #tpu.memory_space<vmem>>, vector<1x128xf32>
    %cst_10 = arith.constant dense<0.000000e+00> : vector<1x128xf32>
    %11 = tpu.matmul %10, %3, %cst_10 {dimension_numbers = #tpu.dot_dimension_numbers<[1], [1], [0], [0], [0, 0, 1, 0], [], []>} : vector<1x128xf32>, vector<128x128xf32>, vector<1x128xf32> -> vector<1x128xf32>
    %c0_11 = arith.constant 0 : index
    %c0_12 = arith.constant 0 : index
    %12 = vector.load %arg7[%c0_11, %c0_12] : memref<1x128xf32, #tpu.memory_space<vmem>>, vector<1x128xf32>
    tpu.vector_store %arg7[%c0_11, %c0_12], %11 {strides = array<i32>} : memref<1x128xf32, #tpu.memory_space<vmem>>, vector<1x128xf32>,
    %13 = arith.truncf %3 : vector<128x128xf32> to vector<128x128xbf16>
    %c0_13 = arith.constant 0 : index
    %c0_14 = arith.constant 0 : index
    %14 = vector.load %arg5[%c0_13, %c0_14] : memref<128x128xbf16, #tpu.memory_space<vmem>>, vector<128x128xbf16>
    tpu.vector_store %arg5[%c0_13, %c0_14], %13 {strides = array<i32>} : memref<128x128xbf16, #tpu.memory_space<vmem>>, vector<128x128xbf16>,
    return
  }
  func.func @transform_0(%arg0: i32) -> (i32, i32) {
    %c0_i32 = arith.constant 0 : i32
    %c0_i32_0 = arith.constant 0 : i32
    return %arg0, %c0_i32 : i32, i32
  }
  func.func @transform_1(%arg0: i32) -> (i32, i32) {
    %c0_i32 = arith.constant 0 : i32
    %c0_i32_0 = arith.constant 0 : i32
    %c0_i32_1 = arith.constant 0 : i32
    return %c0_i32, %c0_i32_0 : i32, i32
  }
  func.func @transform_2(%arg0: i32) -> (i32, i32) {
    %c0_i32 = arith.constant 0 : i32
    %c0_i32_0 = arith.constant 0 : i32
    %c0_i32_1 = arith.constant 0 : i32
    return %c0_i32, %c0_i32_0 : i32, i32
  }
  func.func @transform_3(%arg0: i32) -> (i32, i32) {
    %c0_i32 = arith.constant 0 : i32
    %c0_i32_0 = arith.constant 0 : i32
    %c0_i32_1 = arith.constant 0 : i32
    return %c0_i32, %c0_i32_0 : i32, i32
  }
  func.func @transform_4(%arg0: i32) -> (i32, i32) {
    %c0_i32 = arith.constant 0 : i32
    %c0_i32_0 = arith.constant 0 : i32
    return %arg0, %c0_i32 : i32, i32
  }
  func.func @transform_5(%arg0: i32) -> (i32, i32) {
    %c0_i32 = arith.constant 0 : i32
    %c0_i32_0 = arith.constant 0 : i32
    return %arg0, %c0_i32 : i32, i32
  }
  func.func @transform_6(%arg0: i32) -> (i32, i32) {
    %c0_i32 = arith.constant 0 : i32
    %c0_i32_0 = arith.constant 0 : i32
    return %c0_i32, %arg0 : i32, i32
  }
}

</mosaic_0001>

<llo_original>
// kernel: tpu_custom_call.1
$region0: #{tpu_custom_call.1}
  #allocation0 [shape = 'u32[]', space=smem, size = 0x4, offset = 0x4, fixed_abs, tag = 'smem constant byte address 0x4 - core index']
  #allocation1 [shape = 'u32[72,128]{1,0:T(1,128)}', space=vmem, size = 0x9000, scoped, tag = 'internal scratch']
  %s0 = inlined_call_operand.hbm [shape: f32[256,128], index: 0, kind: input, shape index: {}]
  %s1 = inlined_call_operand.hbm [shape: bf16[128,128], index: 1, kind: input, shape index: {}]
  %s2 = inlined_call_operand.vmem [shape: f32[1,128], index: 2, kind: input, shape index: {}]
  %s3 = inlined_call_operand.vmem [shape: f32[1,128], index: 3, kind: input, shape index: {}]
  %s4 = inlined_call_operand.hbm [shape: bf16[256,128], index: 4, kind: output, shape index: {0}]
  %s5 = inlined_call_operand.vmem [shape: f32[256,1], index: 5, kind: output, shape index: {1}]
  %s6 = inlined_call_operand.hbm [shape: f32[1,256], index: 6, kind: output, shape index: {2}]
  %7 = xla_tuple %s4, %s5, %s6
  %s8 = sld [smem:[#allocation0]]
  $region73: #{tpu_custom_call.1} parent=0
    _
  %s10 = ssub.s32 1, %s8
  %s11 = scalar_select 0, %s10, %s8
  $region1: #{tpu_custom_call.1} parent=0
    #allocation2 [shape = 'u8[131072]{0}', space=vmem, size = 0x20000, scoped, tag = 'input window, operand 0']
    #allocation3 [shape = 's32[2]{0}', space=sflag, size = 0x8, scoped, tag = 'scoped memory for tpu_custom_call.1']
    #allocation4 [shape = 's32[2]{0}', space=sflag, size = 0x8, scoped, tag = 'scoped memory for tpu_custom_call.1']
    #allocation5 [shape = 'u8[32768]{0}', space=vmem, size = 0x8000, scoped, tag = 'input window, operand 1, single buffered']
    #allocation6 [shape = 's32[1]{0}', space=sflag, size = 0x4, scoped, tag = 'scoped memory for tpu_custom_call.1']
    #allocation7 [shape = 'u8[65536]{0}', space=vmem, size = 0x10000, scoped, tag = 'output window, operand 0']
    #allocation8 [shape = 'u8[1024]{0}', space=vmem, size = 0x400, scoped, tag = 'output window, operand 2']
    #allocation9 [shape = 's32[2]{0}', space=sflag, size = 0x8, scoped, tag = 'scoped memory for tpu_custom_call.1']
    %12 = vsyncpa [#allocation3], 0
    %s13 = scalar_lea.sflag [#allocation3], 1
    %14 = vsyncpa %s13, 0
    %15 = vsyncpa [#allocation6], 0
    %16 = vsyncpa [#allocation4], 0
    %s17 = scalar_lea.sflag [#allocation4], 1
    %18 = vsyncpa %s17, 0
    %19 = vsyncpa [#allocation9], 0
    %s20 = scalar_lea.sflag [#allocation9], 1
    %21 = vsyncpa %s20, 0
    loop: start=0, step=1, limit=4
    $region2: #{tpu_custom_call.1} parent=1 // loop_pre_header
      _
    $region3: #{tpu_custom_call.1} parent=1 // loop_header
      %s23 = sphi 0, %s27
      %p24 = scmp.ge.s32.totalorder %s23, 4
      %s33 = sphi 0, %s35
      %s36 = sphi 0, %s33
      %s37 = sphi 0, %s36
      %s53 = sphi 0, %s37
      %s57 = sphi 0, %s57
      %s59 = sphi 0, %s57
      %s60 = sphi 0, %s59
      %s74 = sphi 0, %s60
      %s78 = sphi 0, %s78
      %s80 = sphi 0, %s78
      %s81 = sphi 0, %s80
      %s95 = sphi 0, %s81
      %s99 = sphi 0, %s99
      %s101 = sphi 0, %s99
      %s102 = sphi 0, %s101
      %s116 = sphi 0, %s102
      %s122 = sphi 0, %s124
      %s125 = sphi 0, %s122
      %s126 = sphi 0, %s125
      %s142 = sphi 0, %s126
      %s148 = sphi 0, %s150
      %s151 = sphi 0, %s148
      %s152 = sphi 0, %s151
      %s168 = sphi 0, %s152
      %s174 = sphi 0, %s176
      %s177 = sphi 0, %s174
      %s178 = sphi 0, %s177
      %s194 = sphi 0, %s178
    $region4: #{tpu_custom_call.1} parent=1 // loop_header_branch
      %26 = sbr.rel (%p24) target = $region8
    $region5: #{tpu_custom_call.1} parent=1 // loop_body
      %s28 = ssub.s32 %s23, 1
      %s29 = ssub.s32 %s23, 2
      %s30 = sadd.s32 %s23, 1
      %s31 = ssub.s32 %s23, %s30
      %p32 = scmp.eq.s32.totalorder %s31, 0
      %s34 = sadd.s32 %s33, 1
      %s35 = scalar_select %p32, %s33, %s34
      %p38 = pneg %p32
      %p39 = scmp.eq.s32.totalorder %s23, 1
      %p40 = por %p38, %p39
      %p41 = scmp.ne.s32.totalorder %s33, %s36
      %p42 = scmp.eq.s32.totalorder %s23, 0
      %p43 = por %p41, %p42
      %p44 = scmp.ne.s32.totalorder %s33, %s36
      %p45 = scmp.eq.s32.totalorder %s28, 1
      %p46 = por %p44, %p45
      %p47 = scmp.ne.s32.totalorder %s36, %s37
      %p48 = scmp.eq.s32.totalorder %s28, 0
      %p49 = por %p47, %p48
      %p50 = scmp.ne.s32.totalorder %s36, %s37
      %p51 = scmp.eq.s32.totalorder %s29, 1
      %p52 = por %p50, %p51
      %p54 = scmp.ne.s32.totalorder %s37, %s53
      %p55 = scmp.eq.s32.totalorder %s29, 0
      %p56 = por %p54, %p55
      %s58 = sadd.s32 %s57, 1
      %p61 = scmp.eq.s32.totalorder %s23, 1
      %p62 = scmp.ne.s32.totalorder %s57, %s59
      %p63 = scmp.eq.s32.totalorder %s23, 0
      %p64 = por %p62, %p63
      %p65 = scmp.ne.s32.totalorder %s57, %s59
      %p66 = scmp.eq.s32.totalorder %s28, 1
      %p67 = por %p65, %p66
      %p68 = scmp.ne.s32.totalorder %s59, %s60
      %p69 = scmp.eq.s32.totalorder %s28, 0
      %p70 = por %p68, %p69
      %p71 = scmp.ne.s32.totalorder %s59, %s60
      %p72 = scmp.eq.s32.totalorder %s29, 1
      %p73 = por %p71, %p72
      %p75 = scmp.ne.s32.totalorder %s60, %s74
      %p76 = scmp.eq.s32.totalorder %s29, 0
      %p77 = por %p75, %p76
      %s79 = sadd.s32 %s78, 1
      %p82 = scmp.eq.s32.totalorder %s23, 1
      %p83 = scmp.ne.s32.totalorder %s78, %s80
      %p84 = scmp.eq.s32.totalorder %s23, 0
      %p85 = por %p83, %p84
      %p86 = scmp.ne.s32.totalorder %s78, %s80
      %p87 = scmp.eq.s32.totalorder %s28, 1
      %p88 = por %p86, %p87
      %p89 = scmp.ne.s32.totalorder %s80, %s81
      %p90 = scmp.eq.s32.totalorder %s28, 0
      %p91 = por %p89, %p90
      %p92 = scmp.ne.s32.totalorder %s80, %s81
      %p93 = scmp.eq.s32.totalorder %s29, 1
      %p94 = por %p92, %p93
      %p96 = scmp.ne.s32.totalorder %s81, %s95
      %p97 = scmp.eq.s32.totalorder %s29, 0
      %p98 = por %p96, %p97
      %s100 = sadd.s32 %s99, 1
      %p103 = scmp.eq.s32.totalorder %s23, 1
      %p104 = scmp.ne.s32.totalorder %s99, %s101
      %p105 = scmp.eq.s32.totalorder %s23, 0
      %p106 = por %p104, %p105
      %p107 = scmp.ne.s32.totalorder %s99, %s101
      %p108 = scmp.eq.s32.totalorder %s28, 1
      %p109 = por %p107, %p108
      %p110 = scmp.ne.s32.totalorder %s101, %s102
      %p111 = scmp.eq.s32.totalorder %s28, 0
      %p112 = por %p110, %p111
      %p113 = scmp.ne.s32.totalorder %s101, %s102
      %p114 = scmp.eq.s32.totalorder %s29, 1
      %p115 = por %p113, %p114
      %p117 = scmp.ne.s32.totalorder %s102, %s116
      %p118 = scmp.eq.s32.totalorder %s29, 0
      %p119 = por %p117, %p118
      %s120 = ssub.s32 %s23, %s30
      %p121 = scmp.eq.s32.totalorder %s120, 0
      %s123 = sadd.s32 %s122, 1
      %s124 = scalar_select %p121, %s122, %s123
      %p127 = pneg %p121
      %p128 = scmp.eq.s32.totalorder %s23, 1
      %p129 = por %p127, %p128
      %p130 = scmp.ne.s32.totalorder %s122, %s125
      %p131 = scmp.eq.s32.totalorder %s23, 0
      %p132 = por %p130, %p131
      %p133 = scmp.ne.s32.totalorder %s122, %s125
      %p134 = scmp.eq.s32.totalorder %s28, 1
      %p135 = por %p133, %p134
      %p136 = scmp.ne.s32.totalorder %s125, %s126
      %p137 = scmp.eq.s32.totalorder %s28, 0
      %p138 = por %p136, %p137
      %p139 = scmp.ne.s32.totalorder %s125, %s126
      %p140 = scmp.eq.s32.totalorder %s29, 1
      %p141 = por %p139, %p140
      %p143 = scmp.ne.s32.totalorder %s126, %s142
      %p144 = scmp.eq.s32.totalorder %s29, 0
      %p145 = por %p143, %p144
      %s146 = ssub.s32 %s23, %s30
      %p147 = scmp.eq.s32.totalorder %s146, 0
      %s149 = sadd.s32 %s148, 1
      %s150 = scalar_select %p147, %s148, %s149
      %p153 = pneg %p147
      %p154 = scmp.eq.s32.totalorder %s23, 1
      %p155 = por %p153, %p154
      %p156 = scmp.ne.s32.totalorder %s148, %s151
      %p157 = scmp.eq.s32.totalorder %s23, 0
      %p158 = por %p156, %p157
      %p159 = scmp.ne.s32.totalorder %s148, %s151
      %p160 = scmp.eq.s32.totalorder %s28, 1
      %p161 = por %p159, %p160
      %p162 = scmp.ne.s32.totalorder %s151, %s152
      %p163 = scmp.eq.s32.totalorder %s28, 0
      %p164 = por %p162, %p163
      %p165 = scmp.ne.s32.totalorder %s151, %s152
      %p166 = scmp.eq.s32.totalorder %s29, 1
      %p167 = por %p165, %p166
      %p169 = scmp.ne.s32.totalorder %s152, %s168
      %p170 = scmp.eq.s32.totalorder %s29, 0
      %p171 = por %p169, %p170
      %s172 = ssub.s32 %s23, %s30
      %p173 = scmp.eq.s32.totalorder %s172, 0
      %s175 = sadd.s32 %s174, 1
      %s176 = scalar_select %p173, %s174, %s175
      %p179 = pneg %p173
      %p180 = scmp.eq.s32.totalorder %s23, 1
      %p181 = por %p179, %p180
      %p182 = scmp.ne.s32.totalorder %s174, %s177
      %p183 = scmp.eq.s32.totalorder %s23, 0
      %p184 = por %p182, %p183
      %p185 = scmp.ne.s32.totalorder %s174, %s177
      %p186 = scmp.eq.s32.totalorder %s28, 1
      %p187 = por %p185, %p186
      %p188 = scmp.ne.s32.totalorder %s177, %s178
      %p189 = scmp.eq.s32.totalorder %s28, 0
      %p190 = por %p188, %p189
      %p191 = scmp.ne.s32.totalorder %s177, %s178
      %p192 = scmp.eq.s32.totalorder %s29, 1
      %p193 = por %p191, %p192
      %p195 = scmp.ne.s32.totalorder %s178, %s194
      %p196 = scmp.eq.s32.totalorder %s29, 0
      %p197 = por %p195, %p196
      %p198 = scmp.le.s32.totalorder 1, %s23
      %p199 = scmp.lt.s32.totalorder %s23, 3
      %p200 = pnand %p198, %p199
      %p201 = pneg %p200
      // Predicated region
      $region9: #{tpu_custom_call.1} parent=5 // pred_check
        _
      $region10: #{tpu_custom_call.1} parent=5 // pred_check_branch
        %203 = sbr.rel (%p200) target = $region12
      $region11: #{tpu_custom_call.1} parent=5 // pred_region
        %s204 = ssub.s32 %s23, 1
        // Predicated region
        $region13: #{tpu_custom_call.1} parent=11 // pred_check
          %p205 = pneg %p70
        $region14: #{tpu_custom_call.1} parent=11 // pred_check_branch
          %207 = sbr.rel (%p205) target = $region16
        $region15: #{tpu_custom_call.1} parent=11 // pred_region
          %209 = vsyncadd [#allocation6], 0
          %s210 = sshll.u32 %s1, 4
          %s211 = int_to_ptr.hbm [resolvable:$true] %s210
          %s212 = sshll.u32 [#allocation5], 4
          %s213 = int_to_ptr.vmem [resolvable:$true] %s212
          %218 = dma.hbm_to_vmem [thread:$0]  %s211, 1024, %s213, [#allocation6], 64, 64, 4
        $region16: #{tpu_custom_call.1} parent=11 // pred_fallthru
          _
        // Predicated region
        $region17: #{tpu_custom_call.1} parent=11 // pred_check
          %p219 = pneg %p91
        $region18: #{tpu_custom_call.1} parent=11 // pred_check_branch
          %221 = sbr.rel (%p219) target = $region20
        $region19: #{tpu_custom_call.1} parent=11 // pred_region
          _
        $region20: #{tpu_custom_call.1} parent=11 // pred_fallthru
          _
        // Predicated region
        $region21: #{tpu_custom_call.1} parent=11 // pred_check
          %p222 = pneg %p112
        $region22: #{tpu_custom_call.1} parent=11 // pred_check_branch
          %224 = sbr.rel (%p222) target = $region24
        $region23: #{tpu_custom_call.1} parent=11 // pred_region
          _
        $region24: #{tpu_custom_call.1} parent=11 // pred_fallthru
          _
      $region12: #{tpu_custom_call.1} parent=5 // pred_fallthru
        _
      %p225 = scmp.lt.s32.totalorder %s23, 2
      // Predicated region
      $region25: #{tpu_custom_call.1} parent=5 // pred_check
        %p226 = pneg %p225
      $region26: #{tpu_custom_call.1} parent=5 // pred_check_branch
        %228 = sbr.rel (%p226) target = $region28
      $region27: #{tpu_custom_call.1} parent=5 // pred_region
        // Predicated region
        $region29: #{tpu_custom_call.1} parent=27 // pred_check
          %p229 = pneg %p43
        $region30: #{tpu_custom_call.1} parent=27 // pred_check_branch
          %231 = sbr.rel (%p229) target = $region32
        $region31: #{tpu_custom_call.1} parent=27 // pred_region
          %s232 = sand.u32 %s33, 1
          %s233 = scalar_lea.sflag [#allocation3], %s232
          %s234 = sand.u32 %s33, 1
          %s235 = smul.addr %s234, 128
          %s236 = scalar_lea.vmem [#allocation2], %s235
          %s237 = smul.u32 16, %s23
          %239 = vsyncadd %s233, 0
          %s240 = smul.addr %s237, 8
          %s241 = scalar_lea.hbm %s0, %s240
          %s242 = sshll.u32 %s241, 4
          %s243 = int_to_ptr.hbm [resolvable:$true] %s242
          %s244 = sshll.u32 %s236, 4
          %s245 = int_to_ptr.vmem [resolvable:$true] %s244
          %250 = dma.hbm_to_vmem [thread:$0]  %s243, 2048, %s245, %s233, 128, 128, 8
        $region32: #{tpu_custom_call.1} parent=27 // pred_fallthru
          _
      $region28: #{tpu_custom_call.1} parent=5 // pred_fallthru
        _
      %p251 = scmp.le.s32.totalorder 1, %s23
      %p252 = scmp.lt.s32.totalorder %s23, 3
      %p253 = pnand %p251, %p252
      %p254 = pneg %p253
      // Predicated region
      $region33: #{tpu_custom_call.1} parent=5 // pred_check
        _
      $region34: #{tpu_custom_call.1} parent=5 // pred_check_branch
        %256 = sbr.rel (%p253) target = $region36
      $region35: #{tpu_custom_call.1} parent=5 // pred_region
        %s257 = ssub.s32 %s23, 1
        %s258 = sand.u32 %s36, 1
        %s259 = scalar_lea.sflag [#allocation3], %s258
        %s260 = sand.u32 %s36, 1
        %s261 = smul.addr %s260, 128
        %s262 = scalar_lea.vmem [#allocation2], %s261
        // Predicated region
        $region37: #{tpu_custom_call.1} parent=35 // pred_check
          %p263 = pneg %p49
        $region38: #{tpu_custom_call.1} parent=35 // pred_check_branch
          %265 = sbr.rel (%p263) target = $region40
        $region39: #{tpu_custom_call.1} parent=35 // pred_region
          %267 = dma.done %s259, 2048
        $region40: #{tpu_custom_call.1} parent=35 // pred_fallthru
          _
        // Predicated region
        $region41: #{tpu_custom_call.1} parent=35 // pred_check
          %p268 = pneg %p70
        $region42: #{tpu_custom_call.1} parent=35 // pred_check_branch
          %270 = sbr.rel (%p268) target = $region44
        $region43: #{tpu_custom_call.1} parent=35 // pred_region
          %272 = dma.done [#allocation6], 1024
        $region44: #{tpu_custom_call.1} parent=35 // pred_fallthru
          _
        %s273 = sand.u32 %s36, 1
        %s274 = scalar_lea.sflag [#allocation3], %s273
        %s275 = sand.u32 %s36, 1
        %s276 = smul.addr %s275, 128
        %s277 = scalar_lea.vmem [#allocation2], %s276
        %p278 = pneg %p49
        %p279 = pneg %p46
        %p280 = pneg %p70
        %p281 = pneg %p67
        %p282 = pneg %p91
        %p283 = pneg %p88
        %p284 = pneg %p112
        %p285 = pneg %p109
        %p286 = pneg %p138
        %p287 = pneg %p135
        %s288 = sand.u32 %s125, 1
        %s289 = scalar_lea.sflag [#allocation4], %s288
        %s290 = sand.u32 %s125, 1
        %s291 = smul.addr %s290, 64
        %s292 = scalar_lea.vmem [#allocation7], %s291
        %p293 = pneg %p164
        %p294 = pneg %p161
        %s295 = smul.u32 16, %s28
        %p296 = scmp.lt.s32.totalorder %s295, 31
        %s297 = scalar_select %p296, %s295, 31
        %s298 = smul.addr %s297, 8
        %s299 = scalar_lea.vmem %s5, %s298
        %p300 = pneg %p190
        %p301 = pneg %p187
        %s302 = sand.u32 %s177, 1
        %s303 = scalar_lea.sflag [#allocation9], %s302
        %s304 = sand.u32 %s177, 1
        %s305 = scalar_lea.vmem [#allocation8], %s304
        %s306 = smul.u32 16, %s28
        %s307 = smul.u32 16, %s28
        %s308 = smul.u32 16, %s28
        %p309 = scmp.lt.s32.totalorder %s308, 31
        %s310 = scalar_select %p309, %s308, 31
        %s311 = smul.addr %s310, 8
        %s312 = scalar_lea.vmem %s5, %s311
        %s313 = smul.u32 16, %s28
        %v314 = vld [vmem:[%s262] sm:$0xff]
        %v315 = vld [vmem:[%s262 + $0x8] sm:$0xff]
        %v316 = vld [vmem:[%s262 + $0x10] sm:$0xff]
        %v317 = vld [vmem:[%s262 + $0x18] sm:$0xff]
        %v318 = vld [vmem:[%s262 + $0x20] sm:$0xff]
        %v319 = vld [vmem:[%s262 + $0x28] sm:$0xff]
        %v320 = vld [vmem:[%s262 + $0x30] sm:$0xff]
        %v321 = vld [vmem:[%s262 + $0x38] sm:$0xff]
        %v322 = vld [vmem:[%s262 + $0x40] sm:$0xff]
        %v323 = vld [vmem:[%s262 + $0x48] sm:$0xff]
        %v324 = vld [vmem:[%s262 + $0x50] sm:$0xff]
        %v325 = vld [vmem:[%s262 + $0x58] sm:$0xff]
        %v326 = vld [vmem:[%s262 + $0x60] sm:$0xff]
        %v327 = vld [vmem:[%s262 + $0x68] sm:$0xff]
        %v328 = vld [vmem:[%s262 + $0x70] sm:$0xff]
        %v329 = vld [vmem:[%s262 + $0x78] sm:$0xff]
        %v330 = vpack.c.bf16 %v315, %v314
        %v331 = vpack.c.bf16 %v317, %v316
        %v332 = vpack.c.bf16 %v319, %v318
        %v333 = vpack.c.bf16 %v321, %v320
        %v334 = vpack.c.bf16 %v323, %v322
        %v335 = vpack.c.bf16 %v325, %v324
        %v336 = vpack.c.bf16 %v327, %v326
        %v337 = vpack.c.bf16 %v329, %v328
        %v338 = vld [vmem:[#allocation5] sm:$0xf]
        %v339 = vld [vmem:[#allocation5 + $0x4] sm:$0xf]
        %v340 = vld [vmem:[#allocation5 + $0x8] sm:$0xf]
        %v341 = vld [vmem:[#allocation5 + $0xc] sm:$0xf]
        %v342 = vld [vmem:[#allocation5 + $0x10] sm:$0xf]
        %v343 = vld [vmem:[#allocation5 + $0x14] sm:$0xf]
        %v344 = vld [vmem:[#allocation5 + $0x18] sm:$0xf]
        %v345 = vld [vmem:[#allocation5 + $0x1c] sm:$0xf]
        %v346 = vld [vmem:[#allocation5 + $0x20] sm:$0xf]
        %v347 = vld [vmem:[#allocation5 + $0x24] sm:$0xf]
        %v348 = vld [vmem:[#allocation5 + $0x28] sm:$0xf]
        %v349 = vld [vmem:[#allocation5 + $0x2c] sm:$0xf]
        %v350 = vld [vmem:[#allocation5 + $0x30] sm:$0xf]
        %v351 = vld [vmem:[#allocation5 + $0x34] sm:$0xf]
        %v352 = vld [vmem:[#allocation5 + $0x38] sm:$0xf]
        %v353 = vld [vmem:[#allocation5 + $0x3c] sm:$0xf]
        %v370 = vunpack.c.l.b16 %v338
        %v371 = vunpack.c.l.b16 %v339
        %v372 = vunpack.c.l.b16 %v340
        %v373 = vunpack.c.l.b16 %v341
        %v374 = vunpack.c.l.b16 %v342
        %v375 = vunpack.c.l.b16 %v343
        %v376 = vunpack.c.l.b16 %v344
        %v377 = vunpack.c.l.b16 %v345
        %v378 = vunpack.c.l.b16 %v346
        %v379 = vunpack.c.l.b16 %v347
        %v380 = vunpack.c.l.b16 %v348
        %v381 = vunpack.c.l.b16 %v349
        %v382 = vunpack.c.l.b16 %v350
        %v383 = vunpack.c.l.b16 %v351
        %v384 = vunpack.c.l.b16 %v352
        %v385 = vunpack.c.l.b16 %v353
        %v386 = vpack.c.b16 %v371, %v370
        %v387 = vpack.c.b16 %v373, %v372
        %v388 = vpack.c.b16 %v375, %v374
        %v389 = vpack.c.b16 %v377, %v376
        %v390 = vpack.c.b16 %v379, %v378
        %v391 = vpack.c.b16 %v381, %v380
        %v392 = vpack.c.b16 %v383, %v382
        %v393 = vpack.c.b16 %v385, %v384
        %402 = vmatpush.bf16.msra.mxu0 %v393
        %403 = vmatpush.bf16.msra.mxu0 %v392
        %404 = vmatpush.bf16.msra.mxu0 %v391
        %405 = vmatpush.bf16.msra.mxu0 %v390
        %406 = vmatpush.bf16.msra.mxu0 %v389
        %407 = vmatpush.bf16.msra.mxu0 %v388
        %408 = vmatpush.bf16.msra.mxu0 %v387
        %409 = vmatpush.bf16.msra.mxu0 %v386
        %410 = vmatmul.bf16.gmra.mxu0 %v330
        %v411 = vpop.f32.mrf.mxu0
        %v412 = vadd.f32 0.0, %v411
        %v413 = vpop.f32.mrf.mxu0
        %v414 = vadd.f32 0.0, %v413
        %415 = vmatmul.bf16.gmra.mxu0 %v331
        %v416 = vpop.f32.mrf.mxu0
        %v417 = vadd.f32 0.0, %v416
        %v418 = vpop.f32.mrf.mxu0
        %v419 = vadd.f32 0.0, %v418
        %420 = vmatmul.bf16.gmra.mxu0 %v332
        %v421 = vpop.f32.mrf.mxu0
        %v422 = vadd.f32 0.0, %v421
        %v423 = vpop.f32.mrf.mxu0
        %v424 = vadd.f32 0.0, %v423
        %425 = vmatmul.bf16.gmra.mxu0 %v333
        %v426 = vpop.f32.mrf.mxu0
        %v427 = vadd.f32 0.0, %v426
        %v428 = vpop.f32.mrf.mxu0
        %v429 = vadd.f32 0.0, %v428
        %430 = vmatmul.bf16.gmra.mxu0 %v334
        %v431 = vpop.f32.mrf.mxu0
        %v432 = vadd.f32 0.0, %v431
        %v433 = vpop.f32.mrf.mxu0
        %v434 = vadd.f32 0.0, %v433
        %435 = vmatmul.bf16.gmra.mxu0 %v335
        %v436 = vpop.f32.mrf.mxu0
        %v437 = vadd.f32 0.0, %v436
        %v438 = vpop.f32.mrf.mxu0
        %v439 = vadd.f32 0.0, %v438
        %440 = vmatmul.bf16.gmra.mxu0 %v336
        %v441 = vpop.f32.mrf.mxu0
        %v442 = vadd.f32 0.0, %v441
        %v443 = vpop.f32.mrf.mxu0
        %v444 = vadd.f32 0.0, %v443
        %445 = vmatmul.bf16.gmra.mxu0 %v337
        %v446 = vpop.f32.mrf.mxu0
        %v447 = vadd.f32 0.0, %v446
        %v448 = vpop.f32.mrf.mxu0
        %v449 = vadd.f32 0.0, %v448
        %450 = vdwg.mxu0
        %v451 = vld [vmem:[%s3] sm:$0x1]
        %v453 = vperm.slane %v451, 0
        %v455 = vmul.f32 %v412, %v453
        %v456 = vmul.f32 %v414, %v453
        %v457 = vmul.f32 %v417, %v453
        %v458 = vmul.f32 %v419, %v453
        %v459 = vmul.f32 %v422, %v453
        %v460 = vmul.f32 %v424, %v453
        %v461 = vmul.f32 %v427, %v453
        %v462 = vmul.f32 %v429, %v453
        %v463 = vmul.f32 %v432, %v453
        %v464 = vmul.f32 %v434, %v453
        %v465 = vmul.f32 %v437, %v453
        %v466 = vmul.f32 %v439, %v453
        %v467 = vmul.f32 %v442, %v453
        %v468 = vmul.f32 %v444, %v453
        %v469 = vmul.f32 %v447, %v453
        %v470 = vmul.f32 %v449, %v453
        %471 = vadd.xlane.f32.xlu0 %v455
        %v472 = vpop.xlane.xlu0 %471
        %473 = vadd.xlane.f32.xlu0 %v456
        %v474 = vpop.xlane.xlu0 %473
        %475 = vadd.xlane.f32.xlu0 %v457
        %v476 = vpop.xlane.xlu0 %475
        %477 = vadd.xlane.f32.xlu0 %v458
        %v478 = vpop.xlane.xlu0 %477
        %479 = vadd.xlane.f32.xlu0 %v459
        %v480 = vpop.xlane.xlu0 %479
        %481 = vadd.xlane.f32.xlu0 %v460
        %v482 = vpop.xlane.xlu0 %481
        %483 = vadd.xlane.f32.xlu0 %v461
        %v484 = vpop.xlane.xlu0 %483
        %485 = vadd.xlane.f32.xlu0 %v462
        %v486 = vpop.xlane.xlu0 %485
        %487 = vadd.xlane.f32.xlu0 %v463
        %v488 = vpop.xlane.xlu0 %487
        %489 = vadd.xlane.f32.xlu0 %v464
        %v490 = vpop.xlane.xlu0 %489
        %491 = vadd.xlane.f32.xlu0 %v465
        %v492 = vpop.xlane.xlu0 %491
        %493 = vadd.xlane.f32.xlu0 %v466
        %v494 = vpop.xlane.xlu0 %493
        %495 = vadd.xlane.f32.xlu0 %v467
        %v496 = vpop.xlane.xlu0 %495
        %497 = vadd.xlane.f32.xlu0 %v468
        %v498 = vpop.xlane.xlu0 %497
        %499 = vadd.xlane.f32.xlu0 %v469
        %v500 = vpop.xlane.xlu0 %499
        %501 = vadd.xlane.f32.xlu0 %v470
        %v502 = vpop.xlane.xlu0 %501
        %vm503 = vcmask 7168
        %504 = vst.msk [vmem:[%s312] sm:$0xff] %vm503, %v472
        %505 = vst.msk [vmem:[%s312 + $0x8] sm:$0xff] %vm503, %v474
        %506 = vst.msk [vmem:[%s312 + $0x10] sm:$0xff] %vm503, %v476
        %507 = vst.msk [vmem:[%s312 + $0x18] sm:$0xff] %vm503, %v478
        %508 = vst.msk [vmem:[%s312 + $0x20] sm:$0xff] %vm503, %v480
        %509 = vst.msk [vmem:[%s312 + $0x28] sm:$0xff] %vm503, %v482
        %510 = vst.msk [vmem:[%s312 + $0x30] sm:$0xff] %vm503, %v484
        %511 = vst.msk [vmem:[%s312 + $0x38] sm:$0xff] %vm503, %v486
        %512 = vst.msk [vmem:[%s312 + $0x40] sm:$0xff] %vm503, %v488
        %513 = vst.msk [vmem:[%s312 + $0x48] sm:$0xff] %vm503, %v490
        %514 = vst.msk [vmem:[%s312 + $0x50] sm:$0xff] %vm503, %v492
        %515 = vst.msk [vmem:[%s312 + $0x58] sm:$0xff] %vm503, %v494
        %516 = vst.msk [vmem:[%s312 + $0x60] sm:$0xff] %vm503, %v496
        %517 = vst.msk [vmem:[%s312 + $0x68] sm:$0xff] %vm503, %v498
        %518 = vst.msk [vmem:[%s312 + $0x70] sm:$0xff] %vm503, %v500
        %519 = vst.msk [vmem:[%s312 + $0x78] sm:$0xff] %vm503, %v502
        %v520 = vld [vmem:[%s2] sm:$0x1]
        %521 = vmatpush.xpose.msra.mxu0 %v449
        %522 = vmatpush.xpose.msra.mxu0 %v447
        %523 = vmatpush.xpose.msra.mxu0 %v444
        %524 = vmatpush.xpose.msra.mxu0 %v442
        %525 = vmatpush.xpose.msra.mxu0 %v439
        %526 = vmatpush.xpose.msra.mxu0 %v437
        %527 = vmatpush.xpose.msra.mxu0 %v434
        %528 = vmatpush.xpose.msra.mxu0 %v432
        %529 = vmatpush.xpose.msra.mxu0 %v429
        %530 = vmatpush.xpose.msra.mxu0 %v427
        %531 = vmatpush.xpose.msra.mxu0 %v424
        %532 = vmatpush.xpose.msra.mxu0 %v422
        %533 = vmatpush.xpose.msra.mxu0 %v419
        %534 = vmatpush.xpose.msra.mxu0 %v417
        %535 = vmatpush.xpose.msra.mxu0 %v414
        %536 = vmatpush.xpose.msra.mxu0 %v412
        %537 = vmatmul.f32.gmra.mxu0 %v520
        %v538 = vpop.f32.mrf.mxu0
        %v539 = vadd.f32 0.0, %v538
        %540 = vdwg.mxu0
        %541 = vst [vmem:[%s305] sm:$0x1] %v539
        %v542 = vpack.c.bf16 %v412, %v412
        %v543 = vpack.c.bf16 %v414, %v414
        %v544 = vpack.c.bf16 %v417, %v417
        %v545 = vpack.c.bf16 %v419, %v419
        %v546 = vpack.c.bf16 %v422, %v422
        %v547 = vpack.c.bf16 %v424, %v424
        %v548 = vpack.c.bf16 %v427, %v427
        %v549 = vpack.c.bf16 %v429, %v429
        %v550 = vpack.c.bf16 %v432, %v432
        %v551 = vpack.c.bf16 %v434, %v434
        %v552 = vpack.c.bf16 %v437, %v437
        %v553 = vpack.c.bf16 %v439, %v439
        %v554 = vpack.c.bf16 %v442, %v442
        %v555 = vpack.c.bf16 %v444, %v444
        %v556 = vpack.c.bf16 %v447, %v447
        %v557 = vpack.c.bf16 %v449, %v449
        %558 = vst [vmem:[%s292] sm:$0xf] %v542
        %559 = vst [vmem:[%s292 + $0x4] sm:$0xf] %v543
        %560 = vst [vmem:[%s292 + $0x8] sm:$0xf] %v544
        %561 = vst [vmem:[%s292 + $0xc] sm:$0xf] %v545
        %562 = vst [vmem:[%s292 + $0x10] sm:$0xf] %v546
        %563 = vst [vmem:[%s292 + $0x14] sm:$0xf] %v547
        %564 = vst [vmem:[%s292 + $0x18] sm:$0xf] %v548
        %565 = vst [vmem:[%s292 + $0x1c] sm:$0xf] %v549
        %566 = vst [vmem:[%s292 + $0x20] sm:$0xf] %v550
        %567 = vst [vmem:[%s292 + $0x24] sm:$0xf] %v551
        %568 = vst [vmem:[%s292 + $0x28] sm:$0xf] %v552
        %569 = vst [vmem:[%s292 + $0x2c] sm:$0xf] %v553
        %570 = vst [vmem:[%s292 + $0x30] sm:$0xf] %v554
        %571 = vst [vmem:[%s292 + $0x34] sm:$0xf] %v555
        %572 = vst [vmem:[%s292 + $0x38] sm:$0xf] %v556
        %573 = vst [vmem:[%s292 + $0x3c] sm:$0xf] %v557
        %s574 = sand.u32 %s125, 1
        %s575 = scalar_lea.sflag [#allocation4], %s574
        %s576 = sand.u32 %s125, 1
        %s577 = smul.addr %s576, 64
        %s578 = scalar_lea.vmem [#allocation7], %s577
        %s579 = smul.u32 16, %s28
        %p580 = scmp.lt.s32.totalorder %s579, 31
        %s581 = scalar_select %p580, %s579, 31
        %s582 = smul.addr %s581, 8
        %s583 = scalar_lea.vmem %s5, %s582
        %s584 = sand.u32 %s177, 1
        %s585 = scalar_lea.sflag [#allocation9], %s584
        %s586 = sand.u32 %s177, 1
        %s587 = scalar_lea.vmem [#allocation8], %s586
        // Predicated region
        $region45: #{tpu_custom_call.1} parent=35 // pred_check
          %p588 = pneg %p135
        $region46: #{tpu_custom_call.1} parent=35 // pred_check_branch
          %590 = sbr.rel (%p588) target = $region48
        $region47: #{tpu_custom_call.1} parent=35 // pred_region
          %s591 = smul.u32 16, %s28
          %593 = vsyncadd %s575, 0
          %s594 = smul.addr %s591, 4
          %s595 = scalar_lea.hbm %s4, %s594
          %s596 = sshll.u32 %s578, 4
          %s597 = int_to_ptr.vmem [resolvable:$true] %s596
          %s598 = sshll.u32 %s595, 4
          %s599 = int_to_ptr.hbm [resolvable:$true] %s598
          %604 = dma.vmem_to_hbm [thread:$0]  %s597, 1024, %s599, %s575, 64, 64, 4
        $region48: #{tpu_custom_call.1} parent=35 // pred_fallthru
          _
        // Predicated region
        $region49: #{tpu_custom_call.1} parent=35 // pred_check
          %p605 = pneg %p161
        $region50: #{tpu_custom_call.1} parent=35 // pred_check_branch
          %607 = sbr.rel (%p605) target = $region52
        $region51: #{tpu_custom_call.1} parent=35 // pred_region
          %s608 = smul.u32 16, %s28
        $region52: #{tpu_custom_call.1} parent=35 // pred_fallthru
          _
        // Predicated region
        $region53: #{tpu_custom_call.1} parent=35 // pred_check
          %p609 = pneg %p187
        $region54: #{tpu_custom_call.1} parent=35 // pred_check_branch
          %611 = sbr.rel (%p609) target = $region56
        $region55: #{tpu_custom_call.1} parent=35 // pred_region
          %613 = vsyncadd %s585, 0
          %s614 = scalar_lea.hbm %s6, %s28
          %s616 = sshll.u32 %s587, 4
          %s617 = int_to_ptr.vmem [resolvable:$true] %s616
          %s618 = sshll.u32 %s614, 4
          %s619 = int_to_ptr.hbm [resolvable:$true] %s618
          %621 = dma.vmem_to_hbm [thread:$0]  %s617, 16, %s619, %s585
        $region56: #{tpu_custom_call.1} parent=35 // pred_fallthru
          _
      $region36: #{tpu_custom_call.1} parent=5 // pred_fallthru
        _
      %p622 = scmp.le.s32.totalorder 2, %s23
      // Predicated region
      $region57: #{tpu_custom_call.1} parent=5 // pred_check
        %p623 = pneg %p622
      $region58: #{tpu_custom_call.1} parent=5 // pred_check_branch
        %625 = sbr.rel (%p623) target = $region60
      $region59: #{tpu_custom_call.1} parent=5 // pred_region
        %s626 = ssub.s32 %s23, 2
        // Predicated region
        $region61: #{tpu_custom_call.1} parent=59 // pred_check
          %p627 = pneg %p141
        $region62: #{tpu_custom_call.1} parent=59 // pred_check_branch
          %629 = sbr.rel (%p627) target = $region64
        $region63: #{tpu_custom_call.1} parent=59 // pred_region
          %s630 = sand.u32 %s126, 1
          %s631 = scalar_lea.sflag [#allocation4], %s630
          %s632 = sand.u32 %s126, 1
          %s633 = smul.addr %s632, 64
          %s634 = scalar_lea.vmem [#allocation7], %s633
          %636 = dma.done %s631, 1024
        $region64: #{tpu_custom_call.1} parent=59 // pred_fallthru
          _
        // Predicated region
        $region65: #{tpu_custom_call.1} parent=59 // pred_check
          %p637 = pneg %p167
        $region66: #{tpu_custom_call.1} parent=59 // pred_check_branch
          %639 = sbr.rel (%p637) target = $region68
        $region67: #{tpu_custom_call.1} parent=59 // pred_region
          %s640 = smul.u32 16, %s29
          %p641 = scmp.lt.s32.totalorder %s640, 31
          %s642 = scalar_select %p641, %s640, 31
          %s643 = smul.addr %s642, 8
          %s644 = scalar_lea.vmem %s5, %s643
        $region68: #{tpu_custom_call.1} parent=59 // pred_fallthru
          _
        // Predicated region
        $region69: #{tpu_custom_call.1} parent=59 // pred_check
          %p645 = pneg %p193
        $region70: #{tpu_custom_call.1} parent=59 // pred_check_branch
          %647 = sbr.rel (%p645) target = $region72
        $region71: #{tpu_custom_call.1} parent=59 // pred_region
          %s648 = sand.u32 %s178, 1
          %s649 = scalar_lea.sflag [#allocation9], %s648
          %s650 = sand.u32 %s178, 1
          %s651 = scalar_lea.vmem [#allocation8], %s650
          %653 = dma.done %s649, 16
        $region72: #{tpu_custom_call.1} parent=59 // pred_fallthru
          _
      $region60: #{tpu_custom_call.1} parent=5 // pred_fallthru
        _
    $region6: #{tpu_custom_call.1} parent=1 // loop_footer
      %s27 = sadd.s32 1, %s23
    $region7: #{tpu_custom_call.1} parent=1 // loop_footer_branch
      %22 = sbr.rel target = $region3
    $region8: #{tpu_custom_call.1} parent=1 // loop_exit
      _
    %654 = vsyncpa [#allocation3], 1
    %s655 = scalar_lea.sflag [#allocation3], 1
    %656 = vsyncpa %s655, 1
    %657 = vsyncpa [#allocation6], 1
    %658 = vsyncpa [#allocation4], 1
    %s659 = scalar_lea.sflag [#allocation4], 1
    %660 = vsyncpa %s659, 1
    %661 = vsyncpa [#allocation9], 1
    %s662 = scalar_lea.sflag [#allocation9], 1
    %663 = vsyncpa %s662, 1

</llo_original>
